<compile_context>
chip_gen: v7x
topology: tpu7x:2x2x1
jax: 0.10.0
libtpu: 0.0.40
codegen_flags: <defaults>
</compile_context>

<pallas_src>
import functools

import numpy as np

import jax
import jax.numpy as jnp
from jax.experimental import pallas as pl
from jax.experimental.pallas import tpu as pltpu


# ---------------------------------------------------------------------------
# One-time probe of pltpu.roll's rotation convention.
# ---------------------------------------------------------------------------
_ROLL_FWD_SIGN = None


def _roll_forward_sign():
    """Sign s such that pltpu.roll(x, (s*k) % n, axis=-1)[..., i] == x[..., i+k]."""
    global _ROLL_FWD_SIGN
    if _ROLL_FWD_SIGN is None:
        n = 128

        def _probe(x_ref, o_ref):
            o_ref[...] = pltpu.roll(x_ref[...], shift=n - 1, axis=1)

        x = jnp.arange(8 * n, dtype=jnp.float32).reshape(8, n)
        out = pl.pallas_call(
            _probe, out_shape=jax.ShapeDtypeStruct((8, n), jnp.float32))(x)
        # jnp.roll convention: roll(x, n-1)[0, 0] == x[0, 1] == 1.0
        _ROLL_FWD_SIGN = -1 if abs(float(out[0, 0]) - 1.0) < 0.5 else 1
    return _ROLL_FWD_SIGN


# ---------------------------------------------------------------------------
# Kernel: one batch tile -> one scalar partial (already weighted by 1/count).
# ---------------------------------------------------------------------------
def _grad_partial_kernel(w_ref, x_ref, out_ref, *, penalty, compute_dy,
                         shift_w, shift_h, shift_d):
    # Upcast once; for f32 inputs this is a no-op.  (On bf16-native chips the
    # rolls/subs could stay bf16, but f32 keeps parity with the reference.)
    x = x_ref[...].astype(jnp.float32)          # (TB, D*H*W)
    w = w_ref[...]                              # (3,  D*H*W) f32 weights

    def pen(d):
        return d * d if penalty == 'l2' else jnp.abs(d)

    def fdiff(shift):
        # roll so that position p holds x[p + k]; wrap positions carry finite
        # garbage that is zeroed by the weight vectors below.
        return pltpu.roll(x, shift=shift, axis=1) - x

    acc = pen(fdiff(shift_w)) * w[0:1, :] + pen(fdiff(shift_h)) * w[1:2, :]
    if compute_dy:
        acc = acc + pen(fdiff(shift_d)) * w[2:3, :]

    # Single reduction per block (mostly VPU vreg adds + tiny XLU tail).
    out_ref[0, 0] = jnp.sum(acc)


# ---------------------------------------------------------------------------
# Wrapper
# ---------------------------------------------------------------------------
def grad_loss(y_pred, penalty='l1', loss_mult=None):
    """Pallas equivalent of Grad.forward(y_pred). y_pred: NCHW or NCDHW."""
    pred_shape = y_pred.shape
    if len(pred_shape) == 4:
        x = y_pred[:, :, None, :, :]
    else:
        x = y_pred
    N, C, D, H, W = x.shape
    B = N * C
    DHW = D * H * W
    compute_dy = not (pred_shape[2] == 1 or len(pred_shape) == 4)

    # Lane-dense collapse: all three finite differences become lane-axis rolls.
    xb = x.reshape(B, DHW)
    # TODO(synk): for volumes where a single (n, c) row (D*H*W elements) no
    # longer fits comfortably in VMEM, add a second grid axis over D with a
    # one-slice halo for the depth difference.

    # Largest batch tile that keeps ~1 MiB per block (2 MiB double-buffered),
    # re-derived conservatively so it also fits v7x's smaller VMEM.
    row_bytes = DHW * np.dtype(x.dtype).itemsize
    tb = max(1, min(B, (1 << 20) // max(row_bytes, 1)))
    if tb < B:
        tb = max(8, (tb // 8) * 8)          # keep sublane tiling (8) aligned
    num_blocks = -(-B // tb)
    b_pad = num_blocks * tb
    if b_pad != B:
        # Zero rows contribute zero diffs (all rolls stay within a row).
        xb = jnp.pad(xb, ((0, b_pad - B), (0, 0)))

    # Per-lane weights: 1/count where the forward difference along each axis
    # is valid, 0 at wrap-around positions (folds the three means into one
    # fused sum).  max(.,1) guards degenerate H==1 / W==1 shapes.
    nz = B * D * H * max(W - 1, 1)          # W-direction diffs ('dz' in ref)
    nx = B * D * max(H - 1, 1) * W          # H-direction diffs ('dx')
    ny = B * max(D - 1, 1) * H * W          # D-direction diffs ('dy')
    pos = np.arange(DHW)
    w_i = pos % W
    h_i = (pos // W) % H
    d_i = pos // (W * H)
    wz = np.where(w_i < W - 1, 1.0 / nz, 0.0)
    wx = np.where(h_i < H - 1, 1.0 / nx, 0.0)
    wy = np.where(d_i < D - 1, 1.0 / ny, 0.0) if compute_dy else np.zeros(DHW)
    weights = jnp.asarray(np.stack([wz, wx, wy]).astype(np.float32))  # (3, DHW)

    s = _roll_forward_sign()
    kernel = functools.partial(
        _grad_partial_kernel, penalty=penalty, compute_dy=compute_dy,
        shift_w=(s * 1) % DHW, shift_h=(s * W) % DHW, shift_d=(s * W * H) % DHW)

    partials = pl.pallas_call(
        kernel,
        out_shape=jax.ShapeDtypeStruct((num_blocks, 1), jnp.float32),
        grid=(num_blocks,),
        in_specs=[pl.BlockSpec((3, DHW), lambda g: (0, 0)),
                  pl.BlockSpec((tb, DHW), lambda g: (g, 0))],
        out_specs=pl.BlockSpec((1, 1), lambda g: (g, 0),
                               memory_space=pltpu.MemorySpace.SMEM),
        compiler_params=pltpu.CompilerParams(
            dimension_semantics=("parallel",),
            vmem_limit_bytes=32 * 1024 * 1024),
    )(weights, xb)

    grad = jnp.sum(partials) / 3.0
    if loss_mult is not None:
        grad = grad * loss_mult
    return grad


# ---------------------------------------------------------------------------
# Pure-JAX reference mirroring the PyTorch forward exactly.
# ---------------------------------------------------------------------------
def grad_ref(y_pred, penalty='l1', loss_mult=None):
    pred_shape = y_pred.shape
    yp = y_pred[:, :, None, :, :] if len(pred_shape) == 4 else y_pred
    dy = jnp.abs(yp[:, :, 1:, :, :] - yp[:, :, :-1, :, :])
    dx = jnp.abs(yp[:, :, :, 1:, :] - yp[:, :, :, :-1, :])
    dz = jnp.abs(yp[:, :, :, :, 1:] - yp[:, :, :, :, :-1])
    if penalty == 'l2':
        dy, dx, dz = dy * dy, dx * dx, dz * dz
    dy_mean = (jnp.float32(0.0)
               if (pred_shape[2] == 1 or len(pred_shape) == 4)
               else jnp.mean(dy))
    d = jnp.mean(dx) + jnp.mean(dz) + dy_mean
    g = d / 3.0
    if loss_mult is not None:
        g = g * loss_mult
    return g


if __name__ == "__main__":
    key = jax.random.PRNGKey(0)
    k1, k2 = jax.random.split(key)

    # 4-D case (NCHW) — dy branch disabled, matches torch.unsqueeze path.
    x4 = jax.random.normal(k1, (2, 4, 16, 16), jnp.float32)
    # 5-D case (NCDHW) — exercises the dy (depth) term and loss_mult.
    x5 = jax.random.normal(k2, (2, 3, 4, 16, 16), jnp.float32)

    out_l1_4d = jax.block_until_ready(grad_loss(x4, penalty='l1'))
    out_l2_4d = jax.block_until_ready(grad_loss(x4, penalty='l2'))
    out_l1_5d = jax.block_until_ready(grad_loss(x5, penalty='l1', loss_mult=2.0))
    out_l2_5d = jax.block_until_ready(grad_loss(x5, penalty='l2'))

    ref_l1_4d = grad_ref(x4, penalty='l1')
    ref_l2_4d = grad_ref(x4, penalty='l2')
    ref_l1_5d = grad_ref(x5, penalty='l1', loss_mult=2.0)
    ref_l2_5d = grad_ref(x5, penalty='l2')

    assert jnp.allclose(out_l1_4d, ref_l1_4d, rtol=1e-5, atol=1e-6), (out_l1_4d, ref_l1_4d)
    assert jnp.allclose(out_l2_4d, ref_l2_4d, rtol=1e-5, atol=1e-6), (out_l2_4d, ref_l2_4d)
    assert jnp.allclose(out_l1_5d, ref_l1_5d, rtol=1e-5, atol=1e-6), (out_l1_5d, ref_l1_5d)
    assert jnp.allclose(out_l2_5d, ref_l2_5d, rtol=1e-5, atol=1e-6), (out_l2_5d, ref_l2_5d)

    print("KERNEL_OK")
</pallas_src>

<mosaic_0001>
module attributes {stable_mosaic.version = 11 : i64} {
  func.func @_probe(%arg0: memref<8x128xf32, #tpu.memory_space<vmem>>, %arg1: memref<8x128xf32, #tpu.memory_space<vmem>>) attributes {dimension_semantics = [], scalar_prefetch = 0 : i64, scratch_operands = 0 : i64, tpu.core_type = #tpu.core_type<tc>} {
    %c0 = arith.constant 0 : index
    %c0_0 = arith.constant 0 : index
    %0 = vector.load %arg0[%c0, %c0_0] : memref<8x128xf32, #tpu.memory_space<vmem>>, vector<8x128xf32>
    %c127_i32 = arith.constant 127 : i32
    %1 = tpu.dynamic_rotate %0 by %c127_i32 dim 1 : vector<8x128xf32>, i32 -> vector<8x128xf32>
    %c0_1 = arith.constant 0 : index
    %c0_2 = arith.constant 0 : index
    %2 = vector.load %arg1[%c0_1, %c0_2] : memref<8x128xf32, #tpu.memory_space<vmem>>, vector<8x128xf32>
    tpu.vector_store %arg1[%c0_1, %c0_2], %1 {strides = array<i32>} : memref<8x128xf32, #tpu.memory_space<vmem>>, vector<8x128xf32>,
    return
  }
}

</mosaic_0001>

<llo_original>
// kernel: tpu_custom_call.1
$region0: #{tpu_custom_call.1}
  #allocation0 [shape = 'u32[]', space=smem, size = 0x4, offset = 0x4, fixed_abs, tag = 'smem constant byte address 0x4 - core index']
  #allocation1 [shape = 'u32[144,128]{1,0:T(1,128)}', space=vmem, size = 0x12000, scoped, tag = 'internal scratch']
  %s0 = inlined_call_operand.hbm [shape: f32[8,128], index: 0, kind: input, shape index: {}]
  %s1 = inlined_call_operand.hbm [shape: f32[8,128], index: 1, kind: output, shape index: {}]
  %s2 = sld [smem:[#allocation0]]
  $region18: #{tpu_custom_call.1} parent=0
    _
  %s4 = ssub.s32 1, %s2
  %s5 = scalar_select 0, %s4, %s2
  $region1: #{tpu_custom_call.1} parent=0
    #allocation2 [shape = 'u8[4096]{0}', space=vmem, size = 0x1000, scoped, tag = 'input window, operand 0, single buffered']
    #allocation3 [shape = 's32[1]{0}', space=sflag, size = 0x4, scoped, tag = 'scoped memory for tpu_custom_call.1']
    #allocation4 [shape = 's32[1]{0}', space=sflag, size = 0x4, scoped, tag = 'scoped memory for tpu_custom_call.1']
    #allocation5 [shape = 'u8[4096]{0}', space=vmem, size = 0x1000, scoped, tag = 'output window, operand 0, single buffered']
    %6 = vsyncpa [#allocation3], 0
    %7 = vsyncpa [#allocation4], 0
    // Predicated region
    $region2: #{tpu_custom_call.1} parent=1 // pred_check
      _
    $region3: #{tpu_custom_call.1} parent=1 // pred_check_branch
      %9 = sbr.rel (0) target = $region5
    $region4: #{tpu_custom_call.1} parent=1 // pred_region
      %s11 = ssub.s32 128, 128
      %12 = vsyncadd [#allocation3], %s11
      %s14 = sshll.u32 [#allocation2], 4
      %s15 = int_to_ptr.vmem [resolvable:$true] %s14
      %17 = dma.hbm_to_vmem [thread:$0]  %s0, 128, %s15, [#allocation3]
    $region5: #{tpu_custom_call.1} parent=1 // pred_fallthru
      _
    // Predicated region
    $region6: #{tpu_custom_call.1} parent=1 // pred_check
      _
    $region7: #{tpu_custom_call.1} parent=1 // pred_check_branch
      %19 = sbr.rel (0) target = $region9
    $region8: #{tpu_custom_call.1} parent=1 // pred_region
      %20 = dma.done [#allocation3], 128
    $region9: #{tpu_custom_call.1} parent=1 // pred_fallthru
      _
    %v21 = vld [vmem:[#allocation2] sm:$0xff]
    %22 = vrot.lane.b32.xlu0 %v21, 127
    %v23 = vpop.permute.xlu0 %22
    %24 = vst [vmem:[#allocation5] sm:$0xff] %v23
    // Predicated region
    $region10: #{tpu_custom_call.1} parent=1 // pred_check
      _
    $region11: #{tpu_custom_call.1} parent=1 // pred_check_branch
      %26 = sbr.rel (0) target = $region13
    $region12: #{tpu_custom_call.1} parent=1 // pred_region
      %s28 = ssub.s32 128, 128
      %29 = vsyncadd [#allocation4], %s28
      %s31 = sshll.u32 [#allocation5], 4
      %s32 = int_to_ptr.vmem [resolvable:$true] %s31
      %34 = dma.vmem_to_hbm [thread:$0]  %s32, 128, %s1, [#allocation4]
    $region13: #{tpu_custom_call.1} parent=1 // pred_fallthru
      _
    // Predicated region
    $region14: #{tpu_custom_call.1} parent=1 // pred_check
      _
    $region15: #{tpu_custom_call.1} parent=1 // pred_check_branch
      %36 = sbr.rel (0) target = $region17
    $region16: #{tpu_custom_call.1} parent=1 // pred_region
      %37 = dma.done [#allocation4], 128
    $region17: #{tpu_custom_call.1} parent=1 // pred_fallthru
      _
    %38 = vsyncpa [#allocation3], 1
    %39 = vsyncpa [#allocation4], 1

</llo_original>
